<compile_context>
chip_gen: v6e
topology: v6e:2x2x1
jax: 0.10.0
libtpu: 0.0.40
codegen_flags: <defaults>
</compile_context>

<pallas_src>
import numpy as np
import jax
import jax.numpy as jnp
from jax.experimental import pallas as pl
from jax.experimental.pallas import tpu as pltpu

_LANE = 128
_OUT_ROWS = 8
_NEG_BIG = -1e30
_PAD_VALUE = -1e4


def _physical_vmem_bytes() -> int:
    try:
        return int(pltpu.get_tpu_info().vmem_capacity_bytes)
    except Exception:
        return 64 * 1024 * 1024  # conservative (v7x-sized) fallback


def _row_alignment(itemsize: int) -> int:
    # f32 packs 8 rows per sublane tile, bf16 16, int8/fp8 32.
    return {4: 8, 2: 16, 1: 32}.get(itemsize, 8)


def _choose_tile_d(d_p, b, itemsize, n_students, block_budget_bytes, max_tile_d=None):
    """Largest feature-dim tile (full d_p, or a 128-multiple divisor) within budget."""
    per_col = b * (4 * itemsize + 4)   # 2 inputs x 2 buffers x itemsize + f32 exp(t) cache
    fixed = (3 * n_students + 4) * b * _LANE * 4 + 2 * b * 4   # online-softmax state
    avail = max(block_budget_bytes - fixed, per_col * min(d_p, _LANE))
    cap = avail // per_col
    if max_tile_d is not None:
        cap = min(cap, int(max_tile_d))
    if d_p <= cap:
        return d_p
    # d_p > cap implies the wrapper already padded d_p to a multiple of 128.
    t = (cap // _LANE) * _LANE
    while t >= _LANE:
        if d_p % t == 0:
            return t
        t -= _LANE
    return _LANE


def _make_distill_kernel(inv_s_temp, inv_t_temp, b, lw, n_lb, n_d_tiles, n_students):
    f32 = jnp.float32

    def kernel(v_ids_ref,                         # scalar prefetch (used by index maps)
               t_ref, s_ref, out_ref,
               et_ref, alpha_ref, m_t_ref, z_t_ref, w_ref, invz_ref,
               m_s_ref, l_s_ref, a_ref, acc_ref):
        del v_ids_ref
        kd = pl.program_id(1)                     # feature-dim tile index
        j = pl.program_id(2)                      # student view within this teacher chunk
        last_kd = n_d_tiles - 1

        # -- per-teacher-chunk init (first grid step of this chunk) --
        @pl.when((kd == 0) & (j == 0))
        def _init_chunk():
            acc_ref[...] = jnp.zeros((b, 1), f32)
            m_t_ref[...] = jnp.full((b, lw), _NEG_BIG, f32)
            z_t_ref[...] = jnp.zeros((b, lw), f32)

        # -- per-pair init (first feature tile of this student view) --
        @pl.when(kd == 0)
        def _init_pair():
            m_s_ref[j] = jnp.full((b, lw), _NEG_BIG, f32)
            l_s_ref[j] = jnp.zeros((b, lw), f32)
            a_ref[j] = jnp.zeros((b, lw), f32)

        # -- teacher tile: computed once per (chunk, kd); reused by all views --
        @pl.when(j == 0)
        def _teacher_tile():
            t = t_ref[...].astype(f32) * inv_t_temp            # (b, tile_d)
            m_old = m_t_ref[...]
            m_new = m_old
            for q in range(n_lb):                              # lane-blocked max (VALU only)
                m_new = jnp.maximum(m_new, t[:, q * lw:(q + 1) * lw])
            alpha = jnp.exp(m_old - m_new)
            z_new = alpha * z_t_ref[...]
            for q in range(n_lb):
                e = jnp.exp(t[:, q * lw:(q + 1) * lw] - m_new)
                et_ref[:, q * lw:(q + 1) * lw] = e             # cache exp(t) for j > 0
                z_new = z_new + e
            m_t_ref[...] = m_new
            z_t_ref[...] = z_new
            alpha_ref[...] = alpha

        # -- student tile: lane-blocked online LSE + teacher-weighted running sum --
        s = s_ref[...].astype(f32) * inv_s_temp                # (b, tile_d)
        m_old = m_s_ref[j]
        m_new = m_old
        for q in range(n_lb):
            m_new = jnp.maximum(m_new, s[:, q * lw:(q + 1) * lw])
        alpha_s = jnp.exp(m_old - m_new)
        l_new = alpha_s * l_s_ref[j]
        a_new = alpha_ref[...] * a_ref[j]
        for q in range(n_lb):
            ssub = s[:, q * lw:(q + 1) * lw]
            l_new = l_new + jnp.exp(ssub - m_new)
            a_new = a_new + et_ref[:, q * lw:(q + 1) * lw] * ssub
        m_s_ref[j] = m_new
        l_s_ref[j] = l_new
        a_ref[j] = a_new

        # -- teacher finalize: collapse lane-blocked stats once per chunk --
        @pl.when((kd == last_kd) & (j == 0))
        def _teacher_final():
            mt = m_t_ref[...]
            mt_row = jnp.max(mt, axis=-1, keepdims=True)       # (b, 1)
            w = jnp.exp(mt - mt_row)                           # (b, lw)
            w_ref[...] = w
            z_row = jnp.sum(w * z_t_ref[...], axis=-1, keepdims=True)
            invz_ref[...] = 1.0 / z_row

        # -- pair finalize: per_row = lse(s) - sum(q * s); accumulate row sums --
        @pl.when(kd == last_kd)
        def _pair_final():
            msj = m_s_ref[j]
            a_row = jnp.sum(w_ref[...] * a_ref[j], axis=-1, keepdims=True)
            ms = jnp.max(msj, axis=-1, keepdims=True)
            ls = jnp.sum(jnp.exp(msj - ms) * l_s_ref[j], axis=-1, keepdims=True)
            per_row = (ms + jnp.log(ls)) - a_row * invz_ref[...]
            acc_ref[...] = acc_ref[...] + per_row

        # -- chunk finalize: write this chunk's (unnormalized) partial sum once --
        @pl.when((kd == last_kd) & (j == n_students - 1))
        def _finish_chunk():
            out_ref[...] = jnp.full((_OUT_ROWS, _LANE), jnp.sum(acc_ref[...]), f32)

    return kernel


class TextDistillLoss:
    """JAX/Pallas port of the PyTorch TextDistillLoss forward pass."""

    def __init__(self, warmup_teacher_temp_epochs: int, nepochs: int,
                 ncrops: int = 2, warmup_teacher_temp: float = 0.07,
                 teacher_temp: float = 0.04, student_temp: float = 0.1):
        self.student_temp = student_temp
        self.ncrops = ncrops
        self.teacher_temp_schedule = np.concatenate((
            np.linspace(warmup_teacher_temp, teacher_temp, warmup_teacher_temp_epochs),
            np.ones(nepochs - warmup_teacher_temp_epochs) * teacher_temp,
        ))

    def __call__(self, student_output: jax.Array, teacher_output: jax.Array,
                 epoch: int, *, max_tile_d=None) -> jax.Array:
        ncrops = self.ncrops
        assert ncrops >= 2
        n_student_rows, d = student_output.shape
        n_teacher_rows, d_t = teacher_output.shape
        assert d == d_t
        assert n_student_rows % ncrops == 0 and n_teacher_rows % 2 == 0
        b = n_student_rows // ncrops
        assert n_teacher_rows // 2 == b, "student/teacher per-view batch must match"

        itemsize = jnp.dtype(student_output.dtype).itemsize
        align = _row_alignment(itemsize)
        # TODO(synk): pad + mask the per-view batch instead of asserting alignment.
        assert b % align == 0, (
            f"per-view batch ({b}) must be a multiple of {align} for "
            f"{student_output.dtype} (packed-sublane alignment)")

        temp = float(self.teacher_temp_schedule[int(epoch)])

        # Pad awkward feature dims (>128, not a multiple of 128) with a large
        # negative constant: padded columns contribute exactly 0 to every softmax
        # statistic (exp underflows to 0), so the loss is unchanged.
        d_p = d
        if d > _LANE and d % _LANE != 0:
            d_p = ((d + _LANE - 1) // _LANE) * _LANE
            pad = ((0, 0), (0, d_p - d))
            student_output = jnp.pad(student_output, pad, constant_values=_PAD_VALUE)
            teacher_output = jnp.pad(teacher_output, pad, constant_values=_PAD_VALUE)

        n_students = ncrops - 1                    # off-diagonal views per teacher chunk
        n_pairs = 2 * n_students
        # Student chunk ids for teacher chunk iq (= leading grid index): all v != iq.
        v_ids = jnp.asarray(
            [v for iq in range(2) for v in range(ncrops) if v != iq], dtype=jnp.int32)

        phys_vmem = _physical_vmem_bytes()
        block_budget = max(8 << 20, int(phys_vmem * 0.35))
        tile_d = _choose_tile_d(d_p, b, itemsize, n_students, block_budget, max_tile_d)
        n_d_tiles = d_p // tile_d
        lw = min(_LANE, tile_d)                    # lane-blocked state width
        n_lb = tile_d // lw                        # 128-lane sub-blocks per tile

        state_bytes = (3 * n_students + 4) * b * lw * 4 + 2 * b * 4
        need_bytes = (4 * b * tile_d * itemsize    # 2 inputs x 2 pipeline buffers
                      + b * tile_d * 4             # exp(t) cache
                      + state_bytes + (8 << 20))   # headroom for compiler scratch
        vmem_limit = int(min(phys_vmem, max(need_bytes, 32 << 20)))

        kernel = _make_distill_kernel(1.0 / self.student_temp, 1.0 / temp,
                                      b, lw, n_lb, n_d_tiles, n_students)

        def t_map(c, kd, j, v_ids_ref):            # constant in j -> teacher tile reused
            return (c, kd)

        def s_map(c, kd, j, v_ids_ref):
            return (v_ids_ref[c * n_students + j], kd)

        def o_map(c, kd, j, v_ids_ref):
            return (c, 0)

        partials = pl.pallas_call(
            kernel,
            out_shape=jax.ShapeDtypeStruct((2 * _OUT_ROWS, _LANE), jnp.float32),
            grid_spec=pltpu.PrefetchScalarGridSpec(
                num_scalar_prefetch=1,
                grid=(2, n_d_tiles, n_students),
                in_specs=[
                    pl.BlockSpec((b, tile_d), t_map),      # teacher chunk tile
                    pl.BlockSpec((b, tile_d), s_map),      # student chunk tile
                ],
                out_specs=pl.BlockSpec((_OUT_ROWS, _LANE), o_map),
                scratch_shapes=[
                    pltpu.VMEM((b, tile_d), jnp.float32),           # exp(t - m_t) cache
                    pltpu.VMEM((b, lw), jnp.float32),               # teacher rescale alpha
                    pltpu.VMEM((b, lw), jnp.float32),               # teacher running max
                    pltpu.VMEM((b, lw), jnp.float32),               # teacher running exp-sum
                    pltpu.VMEM((b, lw), jnp.float32),               # teacher final lane weights
                    pltpu.VMEM((b, 1), jnp.float32),                # 1 / Z_teacher
                    pltpu.VMEM((n_students, b, lw), jnp.float32),   # per-view running max
                    pltpu.VMEM((n_students, b, lw), jnp.float32),   # per-view running exp-sum
                    pltpu.VMEM((n_students, b, lw), jnp.float32),   # per-view weighted sum
                    pltpu.VMEM((b, 1), jnp.float32),                # per-chunk row-loss accum
                ],
            ),
            compiler_params=pltpu.CompilerParams(
                # Leading axis (teacher chunk) is independent work -> megacore sharding.
                # TODO(synk): switch to pltpu.CORE_PARALLEL / tune pl.Buffered(3) pipeline
                # depth on v5e if xprof shows an idle core or exposed DMA.
                dimension_semantics=("parallel", "arbitrary", "arbitrary"),
                vmem_limit_bytes=vmem_limit,
            ),
        )(v_ids, teacher_output, student_output)

        total = partials[0, 0] + partials[_OUT_ROWS, 0]
        return total / jnp.float32(b * n_pairs)


def _reference_loss(student_output, teacher_output, student_temp, temp, ncrops):
    """Pure-JAX reference matching the PyTorch forward (computed in f32)."""
    student_output = student_output.astype(jnp.float32)
    teacher_output = teacher_output.astype(jnp.float32)
    student_out = jnp.split(student_output / student_temp, ncrops, axis=0)
    teacher_out = jnp.split(jax.nn.softmax(teacher_output / temp, axis=-1), 2, axis=0)
    total_loss = 0.0
    n_loss_terms = 0
    for iq, q in enumerate(teacher_out):
        for v in range(len(student_out)):
            if v == iq:
                continue
            loss = jnp.sum(-q * jax.nn.log_softmax(student_out[v], axis=-1), axis=-1)
            total_loss += loss.mean()
            n_loss_terms += 1
    return total_loss / n_loss_terms


if __name__ == "__main__":
    key = jax.random.PRNGKey(0)
    k1, k2, k3, k4, k5, k6 = jax.random.split(key, 6)
    epoch = 3

    # --- Test 1: f32, ncrops=2, tiny D (single tile, lane width < 128) ---
    B, D, NCROPS = 8, 32, 2
    student = jax.random.normal(k1, (NCROPS * B, D), dtype=jnp.float32)
    teacher = jax.random.normal(k2, (2 * B, D), dtype=jnp.float32)
    mod = TextDistillLoss(warmup_teacher_temp_epochs=5, nepochs=20, ncrops=NCROPS)
    loss = jax.block_until_ready(mod(student, teacher, epoch))
    ref = _reference_loss(student, teacher, mod.student_temp,
                          float(mod.teacher_temp_schedule[epoch]), NCROPS)
    assert np.allclose(np.asarray(loss), np.asarray(ref), rtol=2e-5, atol=2e-5), (loss, ref)

    # --- Test 2: bf16, ncrops=4 (teacher-tile reuse), forced D tiling ---
    B2, D2, NCROPS2 = 16, 256, 4
    student2 = jax.random.normal(k3, (NCROPS2 * B2, D2),
                                 dtype=jnp.float32).astype(jnp.bfloat16)
    teacher2 = jax.random.normal(k4, (2 * B2, D2),
                                 dtype=jnp.float32).astype(jnp.bfloat16)
    mod2 = TextDistillLoss(warmup_teacher_temp_epochs=5, nepochs=20, ncrops=NCROPS2)
    loss2 = jax.block_until_ready(mod2(student2, teacher2, epoch, max_tile_d=128))
    ref2 = _reference_loss(student2, teacher2, mod2.student_temp,
                           float(mod2.teacher_temp_schedule[epoch]), NCROPS2)
    assert np.allclose(np.asarray(loss2), np.asarray(ref2), rtol=2e-4, atol=2e-4), (loss2, ref2)

    # --- Test 3: f32, ncrops=3, awkward D=320 (padded to 384) + forced tiling ---
    B3, D3, NCROPS3 = 8, 320, 3
    student3 = jax.random.normal(k5, (NCROPS3 * B3, D3), dtype=jnp.float32)
    teacher3 = jax.random.normal(k6, (2 * B3, D3), dtype=jnp.float32)
    mod3 = TextDistillLoss(warmup_teacher_temp_epochs=5, nepochs=20, ncrops=NCROPS3)
    loss3 = jax.block_until_ready(mod3(student3, teacher3, epoch, max_tile_d=128))
    ref3 = _reference_loss(student3, teacher3, mod3.student_temp,
                           float(mod3.teacher_temp_schedule[epoch]), NCROPS3)
    assert np.allclose(np.asarray(loss3), np.asarray(ref3), rtol=2e-5, atol=2e-5), (loss3, ref3)

    print("KERNEL_OK")
</pallas_src>

<mosaic_0001>
module attributes {stable_mosaic.version = 11 : i64} {
  func.func @kernel(%arg0: i32, %arg1: i32, %arg2: i32, %arg3: memref<2xi32, #tpu.memory_space<smem>>, %arg4: memref<8x32xf32, #tpu.memory_space<vmem>>, %arg5: memref<8x32xf32, #tpu.memory_space<vmem>>, %arg6: memref<8x128xf32, #tpu.memory_space<vmem>>, %arg7: memref<8x32xf32, #tpu.memory_space<vmem>>, %arg8: memref<8x32xf32, #tpu.memory_space<vmem>>, %arg9: memref<8x32xf32, #tpu.memory_space<vmem>>, %arg10: memref<8x32xf32, #tpu.memory_space<vmem>>, %arg11: memref<8x32xf32, #tpu.memory_space<vmem>>, %arg12: memref<8x1xf32, #tpu.memory_space<vmem>>, %arg13: memref<1x8x32xf32, #tpu.memory_space<vmem>>, %arg14: memref<1x8x32xf32, #tpu.memory_space<vmem>>, %arg15: memref<1x8x32xf32, #tpu.memory_space<vmem>>, %arg16: memref<8x1xf32, #tpu.memory_space<vmem>>) attributes {dimension_semantics = [#tpu.dimension_semantics<parallel>, #tpu.dimension_semantics<arbitrary>, #tpu.dimension_semantics<arbitrary>], iteration_bounds = array<i64: 2, 1, 1>, scalar_prefetch = 1 : i64, scratch_operands = 10 : i64, tpu.core_type = #tpu.core_type<tc>, window_params = [{transform_indices = @transform_0, window_bounds = array<i64: 8, 32>}, {transform_indices = @transform_1, window_bounds = array<i64: 8, 32>}, {transform_indices = @transform_2, window_bounds = array<i64: 8, 128>}]} {
    %c0_i32 = arith.constant 0 : i32
    %0 = arith.cmpi eq, %arg1, %c0_i32 : i32
    %c0_i32_0 = arith.constant 0 : i32
    %1 = arith.cmpi eq, %arg2, %c0_i32_0 : i32
    %2 = arith.andi %0, %1 : i1
    %3 = arith.extui %2 : i1 to i32
    %c0_i32_1 = arith.constant 0 : i32
    %4 = arith.cmpi ne, %3, %c0_i32_1 : i32
    scf.if %4 {
      %cst_31 = arith.constant 0.000000e+00 : f32
      %60 = vector.broadcast %cst_31 : f32 to vector<8x1xf32>
      %c0_32 = arith.constant 0 : index
      %c0_33 = arith.constant 0 : index
      %61 = vector.load %arg16[%c0_32, %c0_33] : memref<8x1xf32, #tpu.memory_space<vmem>>, vector<8x1xf32>
      tpu.vector_store %arg16[%c0_32, %c0_33], %60 {strides = array<i32>} : memref<8x1xf32, #tpu.memory_space<vmem>>, vector<8x1xf32>,
      %cst_34 = arith.constant -1.000000e+30 : f32
      %62 = vector.broadcast %cst_34 : f32 to vector<8x32xf32>
      %c0_35 = arith.constant 0 : index
      %c0_36 = arith.constant 0 : index
      %63 = vector.load %arg9[%c0_35, %c0_36] : memref<8x32xf32, #tpu.memory_space<vmem>>, vector<8x32xf32>
      tpu.vector_store %arg9[%c0_35, %c0_36], %62 {strides = array<i32>} : memref<8x32xf32, #tpu.memory_space<vmem>>, vector<8x32xf32>,
      %cst_37 = arith.constant 0.000000e+00 : f32
      %64 = vector.broadcast %cst_37 : f32 to vector<8x32xf32>
      %c0_38 = arith.constant 0 : index
      %c0_39 = arith.constant 0 : index
      %65 = vector.load %arg10[%c0_38, %c0_39] : memref<8x32xf32, #tpu.memory_space<vmem>>, vector<8x32xf32>
      tpu.vector_store %arg10[%c0_38, %c0_39], %64 {strides = array<i32>} : memref<8x32xf32, #tpu.memory_space<vmem>>, vector<8x32xf32>,
    } else {
    }
    %c0_i32_2 = arith.constant 0 : i32
    %5 = arith.cmpi eq, %arg1, %c0_i32_2 : i32
    %6 = arith.extui %5 : i1 to i32
    %c0_i32_3 = arith.constant 0 : i32
    %7 = arith.cmpi ne, %6, %c0_i32_3 : i32
    scf.if %7 {
      %cst_31 = arith.constant -1.000000e+30 : f32
      %60 = vector.broadcast %cst_31 : f32 to vector<8x32xf32>
      %61 = arith.index_cast %arg2 : i32 to index
      %c0_32 = arith.constant 0 : index
      %c0_33 = arith.constant 0 : index
      %62 = vector.load %arg13[%61, %c0_32, %c0_33] : memref<1x8x32xf32, #tpu.memory_space<vmem>>, vector<1x8x32xf32>
      %63 = vector.shape_cast %62 : vector<1x8x32xf32> to vector<8x32xf32>
      %64 = vector.shape_cast %60 : vector<8x32xf32> to vector<1x8x32xf32>
      tpu.vector_store %arg13[%61, %c0_32, %c0_33], %64 {strides = array<i32>} : memref<1x8x32xf32, #tpu.memory_space<vmem>>, vector<1x8x32xf32>,
      %cst_34 = arith.constant 0.000000e+00 : f32
      %65 = vector.broadcast %cst_34 : f32 to vector<8x32xf32>
      %66 = arith.index_cast %arg2 : i32 to index
      %c0_35 = arith.constant 0 : index
      %c0_36 = arith.constant 0 : index
      %67 = vector.load %arg14[%66, %c0_35, %c0_36] : memref<1x8x32xf32, #tpu.memory_space<vmem>>, vector<1x8x32xf32>
      %68 = vector.shape_cast %67 : vector<1x8x32xf32> to vector<8x32xf32>
      %69 = vector.shape_cast %65 : vector<8x32xf32> to vector<1x8x32xf32>
      tpu.vector_store %arg14[%66, %c0_35, %c0_36], %69 {strides = array<i32>} : memref<1x8x32xf32, #tpu.memory_space<vmem>>, vector<1x8x32xf32>,
      %cst_37 = arith.constant 0.000000e+00 : f32
      %70 = vector.broadcast %cst_37 : f32 to vector<8x32xf32>
      %71 = arith.index_cast %arg2 : i32 to index
      %c0_38 = arith.constant 0 : index
      %c0_39 = arith.constant 0 : index
      %72 = vector.load %arg15[%71, %c0_38, %c0_39] : memref<1x8x32xf32, #tpu.memory_space<vmem>>, vector<1x8x32xf32>
      %73 = vector.shape_cast %72 : vector<1x8x32xf32> to vector<8x32xf32>
      %74 = vector.shape_cast %70 : vector<8x32xf32> to vector<1x8x32xf32>
      tpu.vector_store %arg15[%71, %c0_38, %c0_39], %74 {strides = array<i32>} : memref<1x8x32xf32, #tpu.memory_space<vmem>>, vector<1x8x32xf32>,
    } else {
    }
    %c0_i32_4 = arith.constant 0 : i32
    %8 = arith.cmpi eq, %arg2, %c0_i32_4 : i32
    %9 = arith.extui %8 : i1 to i32
    %c0_i32_5 = arith.constant 0 : i32
    %10 = arith.cmpi ne, %9, %c0_i32_5 : i32
    scf.if %10 {
      %c0_31 = arith.constant 0 : index
      %c0_32 = arith.constant 0 : index
      %60 = vector.load %arg4[%c0_31, %c0_32] : memref<8x32xf32, #tpu.memory_space<vmem>>, vector<8x32xf32>
      %cst_33 = arith.constant 21.0526314 : f32
      %61 = vector.broadcast %cst_33 : f32 to vector<8x32xf32>
      %62 = arith.mulf %60, %61 : vector<8x32xf32>
      %c0_34 = arith.constant 0 : index
      %c0_35 = arith.constant 0 : index
      %63 = vector.load %arg9[%c0_34, %c0_35] : memref<8x32xf32, #tpu.memory_space<vmem>>, vector<8x32xf32>
      %64 = arith.maximumf %63, %62 : vector<8x32xf32>
      %65 = arith.subf %63, %64 : vector<8x32xf32>
      %66 = math.exp %65 : vector<8x32xf32>
      %c0_36 = arith.constant 0 : index
      %c0_37 = arith.constant 0 : index
      %67 = vector.load %arg10[%c0_36, %c0_37] : memref<8x32xf32, #tpu.memory_space<vmem>>, vector<8x32xf32>
      %68 = arith.mulf %66, %67 : vector<8x32xf32>
      %69 = arith.subf %62, %64 : vector<8x32xf32>
      %70 = math.exp %69 : vector<8x32xf32>
      %c0_38 = arith.constant 0 : index
      %c0_39 = arith.constant 0 : index
      %71 = vector.load %arg7[%c0_38, %c0_39] : memref<8x32xf32, #tpu.memory_space<vmem>>, vector<8x32xf32>
      tpu.vector_store %arg7[%c0_38, %c0_39], %70 {strides = array<i32>} : memref<8x32xf32, #tpu.memory_space<vmem>>, vector<8x32xf32>,
      %72 = arith.addf %68, %70 : vector<8x32xf32>
      %c0_40 = arith.constant 0 : index
      %c0_41 = arith.constant 0 : index
      %73 = vector.load %arg9[%c0_40, %c0_41] : memref<8x32xf32, #tpu.memory_space<vmem>>, vector<8x32xf32>
      tpu.vector_store %arg9[%c0_40, %c0_41], %64 {strides = array<i32>} : memref<8x32xf32, #tpu.memory_space<vmem>>, vector<8x32xf32>,
      %c0_42 = arith.constant 0 : index
      %c0_43 = arith.constant 0 : index
      %74 = vector.load %arg10[%c0_42, %c0_43] : memref<8x32xf32, #tpu.memory_space<vmem>>, vector<8x32xf32>
      tpu.vector_store %arg10[%c0_42, %c0_43], %72 {strides = array<i32>} : memref<8x32xf32, #tpu.memory_space<vmem>>, vector<8x32xf32>,
      %c0_44 = arith.constant 0 : index
      %c0_45 = arith.constant 0 : index
      %75 = vector.load %arg8[%c0_44, %c0_45] : memref<8x32xf32, #tpu.memory_space<vmem>>, vector<8x32xf32>
      tpu.vector_store %arg8[%c0_44, %c0_45], %66 {strides = array<i32>} : memref<8x32xf32, #tpu.memory_space<vmem>>, vector<8x32xf32>,
    } else {
    }
    %c0 = arith.constant 0 : index
    %c0_6 = arith.constant 0 : index
    %11 = vector.load %arg5[%c0, %c0_6] : memref<8x32xf32, #tpu.memory_space<vmem>>, vector<8x32xf32>
    %cst = arith.constant 1.000000e+01 : f32
    %12 = vector.broadcast %cst : f32 to vector<8x32xf32>
    %13 = arith.mulf %11, %12 : vector<8x32xf32>
    %14 = arith.index_cast %arg2 : i32 to index
    %c0_7 = arith.constant 0 : index
    %c0_8 = arith.constant 0 : index
    %15 = vector.load %arg13[%14, %c0_7, %c0_8] : memref<1x8x32xf32, #tpu.memory_space<vmem>>, vector<1x8x32xf32>
    %16 = vector.shape_cast %15 : vector<1x8x32xf32> to vector<8x32xf32>
    %17 = arith.maximumf %16, %13 : vector<8x32xf32>
    %18 = arith.subf %16, %17 : vector<8x32xf32>
    %19 = math.exp %18 : vector<8x32xf32>
    %20 = arith.index_cast %arg2 : i32 to index
    %c0_9 = arith.constant 0 : index
    %c0_10 = arith.constant 0 : index
    %21 = vector.load %arg14[%20, %c0_9, %c0_10] : memref<1x8x32xf32, #tpu.memory_space<vmem>>, vector<1x8x32xf32>
    %22 = vector.shape_cast %21 : vector<1x8x32xf32> to vector<8x32xf32>
    %23 = arith.mulf %19, %22 : vector<8x32xf32>
    %c0_11 = arith.constant 0 : index
    %c0_12 = arith.constant 0 : index
    %24 = vector.load %arg8[%c0_11, %c0_12] : memref<8x32xf32, #tpu.memory_space<vmem>>, vector<8x32xf32>
    %25 = arith.index_cast %arg2 : i32 to index
    %c0_13 = arith.constant 0 : index
    %c0_14 = arith.constant 0 : index
    %26 = vector.load %arg15[%25, %c0_13, %c0_14] : memref<1x8x32xf32, #tpu.memory_space<vmem>>, vector<1x8x32xf32>
    %27 = vector.shape_cast %26 : vector<1x8x32xf32> to vector<8x32xf32>
    %28 = arith.mulf %24, %27 : vector<8x32xf32>
    %29 = arith.subf %13, %17 : vector<8x32xf32>
    %30 = math.exp %29 : vector<8x32xf32>
    %31 = arith.addf %23, %30 : vector<8x32xf32>
    %c0_15 = arith.constant 0 : index
    %c0_16 = arith.constant 0 : index
    %32 = vector.load %arg7[%c0_15, %c0_16] : memref<8x32xf32, #tpu.memory_space<vmem>>, vector<8x32xf32>
    %33 = arith.mulf %32, %13 : vector<8x32xf32>
    %34 = arith.addf %28, %33 : vector<8x32xf32>
    %35 = arith.index_cast %arg2 : i32 to index
    %c0_17 = arith.constant 0 : index
    %c0_18 = arith.constant 0 : index
    %36 = vector.load %arg13[%35, %c0_17, %c0_18] : memref<1x8x32xf32, #tpu.memory_space<vmem>>, vector<1x8x32xf32>
    %37 = vector.shape_cast %36 : vector<1x8x32xf32> to vector<8x32xf32>
    %38 = vector.shape_cast %17 : vector<8x32xf32> to vector<1x8x32xf32>
    tpu.vector_store %arg13[%35, %c0_17, %c0_18], %38 {strides = array<i32>} : memref<1x8x32xf32, #tpu.memory_space<vmem>>, vector<1x8x32xf32>,
    %39 = arith.index_cast %arg2 : i32 to index
    %c0_19 = arith.constant 0 : index
    %c0_20 = arith.constant 0 : index
    %40 = vector.load %arg14[%39, %c0_19, %c0_20] : memref<1x8x32xf32, #tpu.memory_space<vmem>>, vector<1x8x32xf32>
    %41 = vector.shape_cast %40 : vector<1x8x32xf32> to vector<8x32xf32>
    %42 = vector.shape_cast %31 : vector<8x32xf32> to vector<1x8x32xf32>
    tpu.vector_store %arg14[%39, %c0_19, %c0_20], %42 {strides = array<i32>} : memref<1x8x32xf32, #tpu.memory_space<vmem>>, vector<1x8x32xf32>,
    %43 = arith.index_cast %arg2 : i32 to index
    %c0_21 = arith.constant 0 : index
    %c0_22 = arith.constant 0 : index
    %44 = vector.load %arg15[%43, %c0_21, %c0_22] : memref<1x8x32xf32, #tpu.memory_space<vmem>>, vector<1x8x32xf32>
    %45 = vector.shape_cast %44 : vector<1x8x32xf32> to vector<8x32xf32>
    %46 = vector.shape_cast %34 : vector<8x32xf32> to vector<1x8x32xf32>
    tpu.vector_store %arg15[%43, %c0_21, %c0_22], %46 {strides = array<i32>} : memref<1x8x32xf32, #tpu.memory_space<vmem>>, vector<1x8x32xf32>,
    %c0_i32_23 = arith.constant 0 : i32
    %47 = arith.cmpi eq, %arg1, %c0_i32_23 : i32
    %c0_i32_24 = arith.constant 0 : i32
    %48 = arith.cmpi eq, %arg2, %c0_i32_24 : i32
    %49 = arith.andi %47, %48 : i1
    %50 = arith.extui %49 : i1 to i32
    %c0_i32_25 = arith.constant 0 : i32
    %51 = arith.cmpi ne, %50, %c0_i32_25 : i32
    scf.if %51 {
      %c0_31 = arith.constant 0 : index
      %c0_32 = arith.constant 0 : index
      %60 = vector.load %arg9[%c0_31, %c0_32] : memref<8x32xf32, #tpu.memory_space<vmem>>, vector<8x32xf32>
      %cst_33 = arith.constant dense<0xFF800000> : vector<8xf32>
      %61 = vector.multi_reduction <maximumf>, %60, %cst_33 [1] : vector<8x32xf32> to vector<8xf32>
      %62 = vector.shape_cast %61 : vector<8xf32> to vector<8x1xf32>
      %63 = vector.broadcast %62 : vector<8x1xf32> to vector<8x32xf32>
      %64 = arith.subf %60, %63 : vector<8x32xf32>
      %65 = math.exp %64 : vector<8x32xf32>
      %c0_34 = arith.constant 0 : index
      %c0_35 = arith.constant 0 : index
      %66 = vector.load %arg11[%c0_34, %c0_35] : memref<8x32xf32, #tpu.memory_space<vmem>>, vector<8x32xf32>
      tpu.vector_store %arg11[%c0_34, %c0_35], %65 {strides = array<i32>} : memref<8x32xf32, #tpu.memory_space<vmem>>, vector<8x32xf32>,
      %c0_36 = arith.constant 0 : index
      %c0_37 = arith.constant 0 : index
      %67 = vector.load %arg10[%c0_36, %c0_37] : memref<8x32xf32, #tpu.memory_space<vmem>>, vector<8x32xf32>
      %68 = arith.mulf %65, %67 : vector<8x32xf32>
      %cst_38 = arith.constant dense<0.000000e+00> : vector<8xf32>
      %69 = vector.multi_reduction <add>, %68, %cst_38 [1] : vector<8x32xf32> to vector<8xf32>
      %70 = vector.shape_cast %69 : vector<8xf32> to vector<8x1xf32>
      %cst_39 = arith.constant 1.000000e+00 : f32
      %71 = vector.broadcast %cst_39 : f32 to vector<8x1xf32>
      %72 = arith.divf %71, %70 : vector<8x1xf32>
      %c0_40 = arith.constant 0 : index
      %c0_41 = arith.constant 0 : index
      %73 = vector.load %arg12[%c0_40, %c0_41] : memref<8x1xf32, #tpu.memory_space<vmem>>, vector<8x1xf32>
      tpu.vector_store %arg12[%c0_40, %c0_41], %72 {strides = array<i32>} : memref<8x1xf32, #tpu.memory_space<vmem>>, vector<8x1xf32>,
    } else {
    }
    %c0_i32_26 = arith.constant 0 : i32
    %52 = arith.cmpi eq, %arg1, %c0_i32_26 : i32
    %53 = arith.extui %52 : i1 to i32
    %c0_i32_27 = arith.constant 0 : i32
    %54 = arith.cmpi ne, %53, %c0_i32_27 : i32
    scf.if %54 {
      %60 = arith.index_cast %arg2 : i32 to index
      %c0_31 = arith.constant 0 : index
      %c0_32 = arith.constant 0 : index
      %61 = vector.load %arg13[%60, %c0_31, %c0_32] : memref<1x8x32xf32, #tpu.memory_space<vmem>>, vector<1x8x32xf32>
      %62 = vector.shape_cast %61 : vector<1x8x32xf32> to vector<8x32xf32>
      %c0_33 = arith.constant 0 : index
      %c0_34 = arith.constant 0 : index
      %63 = vector.load %arg11[%c0_33, %c0_34] : memref<8x32xf32, #tpu.memory_space<vmem>>, vector<8x32xf32>
      %64 = arith.index_cast %arg2 : i32 to index
      %c0_35 = arith.constant 0 : index
      %c0_36 = arith.constant 0 : index
      %65 = vector.load %arg15[%64, %c0_35, %c0_36] : memref<1x8x32xf32, #tpu.memory_space<vmem>>, vector<1x8x32xf32>
      %66 = vector.shape_cast %65 : vector<1x8x32xf32> to vector<8x32xf32>
      %67 = arith.mulf %63, %66 : vector<8x32xf32>
      %cst_37 = arith.constant dense<0.000000e+00> : vector<8xf32>
      %68 = vector.multi_reduction <add>, %67, %cst_37 [1] : vector<8x32xf32> to vector<8xf32>
      %69 = vector.shape_cast %68 : vector<8xf32> to vector<8x1xf32>
      %cst_38 = arith.constant dense<0xFF800000> : vector<8xf32>
      %70 = vector.multi_reduction <maximumf>, %62, %cst_38 [1] : vector<8x32xf32> to vector<8xf32>
      %71 = vector.shape_cast %70 : vector<8xf32> to vector<8x1xf32>
      %72 = vector.broadcast %71 : vector<8x1xf32> to vector<8x32xf32>
      %73 = arith.subf %62, %72 : vector<8x32xf32>
      %74 = math.exp %73 : vector<8x32xf32>
      %75 = arith.index_cast %arg2 : i32 to index
      %c0_39 = arith.constant 0 : index
      %c0_40 = arith.constant 0 : index
      %76 = vector.load %arg14[%75, %c0_39, %c0_40] : memref<1x8x32xf32, #tpu.memory_space<vmem>>, vector<1x8x32xf32>
      %77 = vector.shape_cast %76 : vector<1x8x32xf32> to vector<8x32xf32>
      %78 = arith.mulf %74, %77 : vector<8x32xf32>
      %cst_41 = arith.constant dense<0.000000e+00> : vector<8xf32>
      %79 = vector.multi_reduction <add>, %78, %cst_41 [1] : vector<8x32xf32> to vector<8xf32>
      %80 = vector.shape_cast %79 : vector<8xf32> to vector<8x1xf32>
      %81 = math.log %80 : vector<8x1xf32>
      %82 = arith.addf %71, %81 : vector<8x1xf32>
      %c0_42 = arith.constant 0 : index
      %c0_43 = arith.constant 0 : index
      %83 = vector.load %arg12[%c0_42, %c0_43] : memref<8x1xf32, #tpu.memory_space<vmem>>, vector<8x1xf32>
      %84 = arith.mulf %69, %83 : vector<8x1xf32>
      %85 = arith.subf %82, %84 : vector<8x1xf32>
      %c0_44 = arith.constant 0 : index
      %c0_45 = arith.constant 0 : index
      %86 = vector.load %arg16[%c0_44, %c0_45] : memref<8x1xf32, #tpu.memory_space<vmem>>, vector<8x1xf32>
      %87 = arith.addf %86, %85 : vector<8x1xf32>
      %c0_46 = arith.constant 0 : index
      %c0_47 = arith.constant 0 : index
      %88 = vector.load %arg16[%c0_46, %c0_47] : memref<8x1xf32, #tpu.memory_space<vmem>>, vector<8x1xf32>
      tpu.vector_store %arg16[%c0_46, %c0_47], %87 {strides = array<i32>} : memref<8x1xf32, #tpu.memory_space<vmem>>, vector<8x1xf32>,
    } else {
    }
    %c0_i32_28 = arith.constant 0 : i32
    %55 = arith.cmpi eq, %arg1, %c0_i32_28 : i32
    %c0_i32_29 = arith.constant 0 : i32
    %56 = arith.cmpi eq, %arg2, %c0_i32_29 : i32
    %57 = arith.andi %55, %56 : i1
    %58 = arith.extui %57 : i1 to i32
    %c0_i32_30 = arith.constant 0 : i32
    %59 = arith.cmpi ne, %58, %c0_i32_30 : i32
    scf.if %59 {
      %c0_31 = arith.constant 0 : index
      %c0_32 = arith.constant 0 : index
      %60 = vector.load %arg16[%c0_31, %c0_32] : memref<8x1xf32, #tpu.memory_space<vmem>>, vector<8x1xf32>
      %61 = vector.shape_cast %60 : vector<8x1xf32> to vector<1x8x1xf32>
      %cst_33 = arith.constant dense<0.000000e+00> : vector<1xf32>
      %62 = vector.multi_reduction <add>, %61, %cst_33 [1, 2] : vector<1x8x1xf32> to vector<1xf32>
      %63 = vector.shape_cast %62 : vector<1xf32> to vector<1x1x1xf32>
      %64 = vector.extract %63[0, 0, 0] : f32 from vector<1x1x1xf32>
      %65 = vector.broadcast %64 : f32 to vector<8x128xf32>
      %c0_34 = arith.constant 0 : index
      %c0_35 = arith.constant 0 : index
      %66 = vector.load %arg6[%c0_34, %c0_35] : memref<8x128xf32, #tpu.memory_space<vmem>>, vector<8x128xf32>
      tpu.vector_store %arg6[%c0_34, %c0_35], %65 {strides = array<i32>} : memref<8x128xf32, #tpu.memory_space<vmem>>, vector<8x128xf32>,
    } else {
    }
    return
  }
  func.func @transform_0(%arg0: i32, %arg1: i32, %arg2: i32, %arg3: memref<2xi32, #tpu.memory_space<smem>>) -> (i32, i32) {
    %c0_i32 = arith.constant 0 : i32
    return %arg0, %arg1 : i32, i32
  }
  func.func @transform_1(%arg0: i32, %arg1: i32, %arg2: i32, %arg3: memref<2xi32, #tpu.memory_space<smem>>) -> (i32, i32) {
    %c1_i32 = arith.constant 1 : i32
    %0 = arith.muli %arg0, %c1_i32 : i32
    %1 = arith.addi %0, %arg2 : i32
    %2 = arith.index_cast %1 : i32 to index
    %3 = memref.load %arg3[%2] : memref<2xi32, #tpu.memory_space<smem>>
    %c0_i32 = arith.constant 0 : i32
    return %3, %arg1 : i32, i32
  }
  func.func @transform_2(%arg0: i32, %arg1: i32, %arg2: i32, %arg3: memref<2xi32, #tpu.memory_space<smem>>) -> (i32, i32) {
    %c0_i32 = arith.constant 0 : i32
    %c0_i32_0 = arith.constant 0 : i32
    return %arg0, %c0_i32 : i32, i32
  }
}

</mosaic_0001>

<llo_original>
// kernel: tpu_custom_call.1
$region0: #{tpu_custom_call.1}
  #allocation0 [shape = 'u32[]', space=smem, size = 0x4, offset = 0x4, fixed_abs, tag = 'smem constant byte address 0x4 - core index']
  #allocation1 [shape = 'u32[144,128]{1,0:T(1,128)}', space=vmem, size = 0x12000, scoped, tag = 'internal scratch']
  #allocation2 [shape = 'f32[8,32]{1,0:T(8,128)}', space=vmem, size = 0x1000, scoped, tag = 'scratch operand']
  #allocation3 [shape = 'f32[8,32]{1,0:T(8,128)}', space=vmem, size = 0x1000, scoped, tag = 'scratch operand']
  #allocation4 [shape = 'f32[8,32]{1,0:T(8,128)}', space=vmem, size = 0x1000, scoped, tag = 'scratch operand']
  #allocation5 [shape = 'f32[8,32]{1,0:T(8,128)}', space=vmem, size = 0x1000, scoped, tag = 'scratch operand']
  #allocation6 [shape = 'f32[8,32]{1,0:T(8,128)}', space=vmem, size = 0x1000, scoped, tag = 'scratch operand']
  #allocation7 [shape = 'f32[8,1]{1,0:T(8,128)}', space=vmem, size = 0x1000, scoped, tag = 'scratch operand']
  #allocation8 [shape = 'f32[1,8,32]{2,1,0:T(8,128)}', space=vmem, size = 0x1000, scoped, tag = 'scratch operand']
  #allocation9 [shape = 'f32[1,8,32]{2,1,0:T(8,128)}', space=vmem, size = 0x1000, scoped, tag = 'scratch operand']
  #allocation10 [shape = 'f32[1,8,32]{2,1,0:T(8,128)}', space=vmem, size = 0x1000, scoped, tag = 'scratch operand']
  #allocation11 [shape = 'f32[8,1]{1,0:T(8,128)}', space=vmem, size = 0x1000, scoped, tag = 'scratch operand']
  #allocation12 [shape = 's32[1]{0}', space=sflag, size = 0x4, scoped, tag = 'scoped memory for tpu_custom_call.1']
  #allocation13 [shape = 'u8[512]{0}', space=smem, size = 0x200, scoped, tag = 'prefetched SMEM operand 0']
  %s0 = inlined_call_operand.hbm [shape: s32[2], index: 0, kind: input, shape index: {}]
  %s1 = inlined_call_operand.hbm [shape: f32[16,32], index: 1, kind: input, shape index: {}]
  %s2 = inlined_call_operand.hbm [shape: f32[16,32], index: 2, kind: input, shape index: {}]
  %s3 = inlined_call_operand.hbm [shape: f32[16,128], index: 3, kind: output, shape index: {}]
  %s4 = sld [smem:[#allocation0]]
  $region73: #{tpu_custom_call.1} parent=0
    _
  %s6 = ssub.s32 1, %s4
  %s7 = scalar_select 0, %s6, %s4
  %9 = dma.hbm_to_smem %s0, 16, [#allocation13], [#allocation12]
  %10 = dma.done [#allocation12], 16
  %11 = sfence
  $region1: #{tpu_custom_call.1} parent=0
    #allocation14 [shape = 'u8[8192]{0}', space=vmem, size = 0x2000, scoped, tag = 'input window, operand 1']
    #allocation15 [shape = 's32[2]{0}', space=sflag, size = 0x8, scoped, tag = 'scoped memory for tpu_custom_call.1']
    #allocation16 [shape = 's32[2]{0}', space=sflag, size = 0x8, scoped, tag = 'scoped memory for tpu_custom_call.1']
    #allocation17 [shape = 'u8[8192]{0}', space=vmem, size = 0x2000, scoped, tag = 'input window, operand 2']
    #allocation18 [shape = 's32[2]{0}', space=sflag, size = 0x8, scoped, tag = 'scoped memory for tpu_custom_call.1']
    #allocation19 [shape = 'u8[8192]{0}', space=vmem, size = 0x2000, scoped, tag = 'output window, operand 0']
    %12 = vsyncpa [#allocation15], 0
    %s13 = scalar_lea.sflag [#allocation15], 1
    %14 = vsyncpa %s13, 0
    %15 = vsyncpa [#allocation18], 0
    %s16 = scalar_lea.sflag [#allocation18], 1
    %17 = vsyncpa %s16, 0
    %18 = vsyncpa [#allocation16], 0
    %s19 = scalar_lea.sflag [#allocation16], 1
    %20 = vsyncpa %s19, 0
    loop: start=0, step=1, limit=4
    $region2: #{tpu_custom_call.1} parent=1 // loop_pre_header
      _
    $region3: #{tpu_custom_call.1} parent=1 // loop_header
      %s22 = sphi 0, %s26
      %p23 = scmp.ge.s32.totalorder %s22, 4
      %s29 = sphi 0, %s48
      %s30 = sphi 0, %s44
      %s31 = sphi 0, %s40
      %s32 = sphi 0, %s29
      %s33 = sphi 0, %s30
      %s34 = sphi 0, %s31
      %s35 = sphi 0, %s32
      %s36 = sphi 0, %s33
      %s37 = sphi 0, %s34
      %s53 = sphi 0, %s55
      %s56 = sphi 0, %s53
      %s57 = sphi 0, %s56
      %s73 = sphi 0, %s57
      %s85 = sphi 0, %s87
      %s88 = sphi 0, %s85
      %s89 = sphi 0, %s88
      %s105 = sphi 0, %s89
      %s111 = sphi 0, %s113
      %s114 = sphi 0, %s111
      %s115 = sphi 0, %s114
      %s131 = sphi 0, %s115
    $region4: #{tpu_custom_call.1} parent=1 // loop_header_branch
      %25 = sbr.rel (%p23) target = $region8
    $region5: #{tpu_custom_call.1} parent=1 // loop_body
      %s27 = ssub.s32 %s22, 1
      %s28 = ssub.s32 %s22, 2
      %s38 = sadd.s32 1, %s31
      %p39 = scmp.ge.s32.totalorder %s38, 1
      %s40 = scalar_select %p39, 0, %s38
      %s41 = sadd.s32 1, %s30
      %s42 = scalar_select %p39, %s41, %s30
      %p43 = scmp.ge.s32.totalorder %s42, 1
      %s44 = scalar_select %p43, 0, %s42
      %s45 = sadd.s32 1, %s29
      %s46 = scalar_select %p43, %s45, %s29
      %p47 = scmp.ge.s32.totalorder %s46, 2
      %s48 = scalar_select %p47, 0, %s46
      %s49 = ssub.s32 %s29, %s48
      %s50 = ssub.s32 %s30, %s44
      %s51 = sor.u32 %s49, %s50
      %p52 = scmp.eq.s32.totalorder %s51, 0
      %s54 = sadd.s32 %s53, 1
      %s55 = scalar_select %p52, %s53, %s54
      %p58 = pneg %p52
      %p59 = scmp.eq.s32.totalorder %s22, 1
      %p60 = por %p58, %p59
      %p61 = scmp.ne.s32.totalorder %s53, %s56
      %p62 = scmp.eq.s32.totalorder %s22, 0
      %p63 = por %p61, %p62
      %p64 = scmp.ne.s32.totalorder %s53, %s56
      %p65 = scmp.eq.s32.totalorder %s27, 1
      %p66 = por %p64, %p65
      %p67 = scmp.ne.s32.totalorder %s56, %s57
      %p68 = scmp.eq.s32.totalorder %s27, 0
      %p69 = por %p67, %p68
      %p70 = scmp.ne.s32.totalorder %s56, %s57
      %p71 = scmp.eq.s32.totalorder %s28, 1
      %p72 = por %p70, %p71
      %p74 = scmp.ne.s32.totalorder %s57, %s73
      %p75 = scmp.eq.s32.totalorder %s28, 0
      %p76 = por %p74, %p75
      %s77 = sadd.s32 %s29, %s31
      %s78 = sld [smem:[#allocation13 + %s77]]
      %s79 = sadd.s32 %s48, %s40
      %s80 = sld [smem:[#allocation13 + %s79]]
      %s81 = ssub.s32 %s78, %s80
      %s82 = ssub.s32 %s30, %s44
      %s83 = sor.u32 %s81, %s82
      %p84 = scmp.eq.s32.totalorder %s83, 0
      %s86 = sadd.s32 %s85, 1
      %s87 = scalar_select %p84, %s85, %s86
      %p90 = pneg %p84
      %p91 = scmp.eq.s32.totalorder %s22, 1
      %p92 = por %p90, %p91
      %p93 = scmp.ne.s32.totalorder %s85, %s88
      %p94 = scmp.eq.s32.totalorder %s22, 0
      %p95 = por %p93, %p94
      %p96 = scmp.ne.s32.totalorder %s85, %s88
      %p97 = scmp.eq.s32.totalorder %s27, 1
      %p98 = por %p96, %p97
      %p99 = scmp.ne.s32.totalorder %s88, %s89
      %p100 = scmp.eq.s32.totalorder %s27, 0
      %p101 = por %p99, %p100
      %p102 = scmp.ne.s32.totalorder %s88, %s89
      %p103 = scmp.eq.s32.totalorder %s28, 1
      %p104 = por %p102, %p103
      %p106 = scmp.ne.s32.totalorder %s89, %s105
      %p107 = scmp.eq.s32.totalorder %s28, 0
      %p108 = por %p106, %p107
      %s109 = ssub.s32 %s29, %s48
      %p110 = scmp.eq.s32.totalorder %s109, 0
      %s112 = sadd.s32 %s111, 1
      %s113 = scalar_select %p110, %s111, %s112
      %p116 = pneg %p110
      %p117 = scmp.eq.s32.totalorder %s22, 1
      %p118 = por %p116, %p117
      %p119 = scmp.ne.s32.totalorder %s111, %s114
      %p120 = scmp.eq.s32.totalorder %s22, 0
      %p121 = por %p119, %p120
      %p122 = scmp.ne.s32.totalorder %s111, %s114
      %p123 = scmp.eq.s32.totalorder %s27, 1
      %p124 = por %p122, %p123
      %p125 = scmp.ne.s32.totalorder %s114, %s115
      %p126 = scmp.eq.s32.totalorder %s27, 0
      %p127 = por %p125, %p126
      %p128 = scmp.ne.s32.totalorder %s114, %s115
      %p129 = scmp.eq.s32.totalorder %s28, 1
      %p130 = por %p128, %p129
      %p132 = scmp.ne.s32.totalorder %s115, %s131
      %p133 = scmp.eq.s32.totalorder %s28, 0
      %p134 = por %p132, %p133
      %p135 = scmp.le.s32.totalorder 1, %s22
      %p136 = scmp.lt.s32.totalorder %s22, 3
      %p137 = pnand %p135, %p136
      %p138 = pneg %p137
      // Predicated region
      $region9: #{tpu_custom_call.1} parent=5 // pred_check
        _
      $region10: #{tpu_custom_call.1} parent=5 // pred_check_branch
        %140 = sbr.rel (%p137) target = $region12
      $region11: #{tpu_custom_call.1} parent=5 // pred_region
        %s141 = ssub.s32 %s22, 1
      $region12: #{tpu_custom_call.1} parent=5 // pred_fallthru
        _
      %p142 = scmp.lt.s32.totalorder %s22, 2
      // Predicated region
      $region13: #{tpu_custom_call.1} parent=5 // pred_check
        %p143 = pneg %p142
      $region14: #{tpu_custom_call.1} parent=5 // pred_check_branch
        %145 = sbr.rel (%p143) target = $region16
      $region15: #{tpu_custom_call.1} parent=5 // pred_region
        // Predicated region
        $region17: #{tpu_custom_call.1} parent=15 // pred_check
          %p146 = pneg %p63
        $region18: #{tpu_custom_call.1} parent=15 // pred_check_branch
          %148 = sbr.rel (%p146) target = $region20
        $region19: #{tpu_custom_call.1} parent=15 // pred_region
          %s149 = sand.u32 %s53, 1
          %s150 = scalar_lea.sflag [#allocation15], %s149
          %s151 = sand.u32 %s53, 1
          %s152 = smul.addr %s151, 8
          %s153 = scalar_lea.vmem [#allocation14], %s152
          %s155 = ssub.s32 128, 128
          %156 = vsyncadd %s150, %s155
          %s157 = sadd.s32 %s30, %s29
          %s158 = smul.addr %s157, 128
          %s159 = scalar_lea.hbm %s1, %s158
          %s161 = sshll.u32 %s153, 4
          %s162 = int_to_ptr.vmem [resolvable:$true] %s161
          %164 = dma.hbm_to_vmem [thread:$0]  %s159, 128, %s162, %s150
        $region20: #{tpu_custom_call.1} parent=15 // pred_fallthru
          _
        // Predicated region
        $region21: #{tpu_custom_call.1} parent=15 // pred_check
          %p165 = pneg %p95
        $region22: #{tpu_custom_call.1} parent=15 // pred_check_branch
          %167 = sbr.rel (%p165) target = $region24
        $region23: #{tpu_custom_call.1} parent=15 // pred_region
          %s168 = sand.u32 %s85, 1
          %s169 = scalar_lea.sflag [#allocation18], %s168
          %s170 = sand.u32 %s85, 1
          %s171 = smul.addr %s170, 8
          %s172 = scalar_lea.vmem [#allocation17], %s171
          %s173 = sadd.s32 %s29, %s31
          %s174 = sld [smem:[#allocation13 + %s173]]
          %s176 = ssub.s32 128, 128
          %177 = vsyncadd %s169, %s176
          %s178 = sadd.s32 %s30, %s174
          %s179 = smul.addr %s178, 128
          %s180 = scalar_lea.hbm %s2, %s179
          %s182 = sshll.u32 %s172, 4
          %s183 = int_to_ptr.vmem [resolvable:$true] %s182
          %185 = dma.hbm_to_vmem [thread:$0]  %s180, 128, %s183, %s169
        $region24: #{tpu_custom_call.1} parent=15 // pred_fallthru
          _
      $region16: #{tpu_custom_call.1} parent=5 // pred_fallthru
        _
      %p186 = scmp.le.s32.totalorder 1, %s22
      %p187 = scmp.lt.s32.totalorder %s22, 3
      %p188 = pnand %p186, %p187
      %p189 = pneg %p188
      // Predicated region
      $region25: #{tpu_custom_call.1} parent=5 // pred_check
        _
      $region26: #{tpu_custom_call.1} parent=5 // pred_check_branch
        %191 = sbr.rel (%p188) target = $region28
      $region27: #{tpu_custom_call.1} parent=5 // pred_region
        %s192 = ssub.s32 %s22, 1
        %s193 = sand.u32 %s56, 1
        %s194 = scalar_lea.sflag [#allocation15], %s193
        %s195 = sand.u32 %s56, 1
        %s196 = smul.addr %s195, 8
        %s197 = scalar_lea.vmem [#allocation14], %s196
        // Predicated region
        $region29: #{tpu_custom_call.1} parent=27 // pred_check
          %p198 = pneg %p69
        $region30: #{tpu_custom_call.1} parent=27 // pred_check_branch
          %200 = sbr.rel (%p198) target = $region32
        $region31: #{tpu_custom_call.1} parent=27 // pred_region
          %201 = dma.done %s194, 128
        $region32: #{tpu_custom_call.1} parent=27 // pred_fallthru
          _
        %s202 = sand.u32 %s88, 1
        %s203 = scalar_lea.sflag [#allocation18], %s202
        %s204 = sand.u32 %s88, 1
        %s205 = smul.addr %s204, 8
        %s206 = scalar_lea.vmem [#allocation17], %s205
        // Predicated region
        $region33: #{tpu_custom_call.1} parent=27 // pred_check
          %p207 = pneg %p101
        $region34: #{tpu_custom_call.1} parent=27 // pred_check_branch
          %209 = sbr.rel (%p207) target = $region36
        $region35: #{tpu_custom_call.1} parent=27 // pred_region
          %210 = dma.done %s203, 128
        $region36: #{tpu_custom_call.1} parent=27 // pred_fallthru
          _
        %s211 = sand.u32 %s56, 1
        %s212 = scalar_lea.sflag [#allocation15], %s211
        %s213 = sand.u32 %s56, 1
        %s214 = smul.addr %s213, 8
        %s215 = scalar_lea.vmem [#allocation14], %s214
        %p216 = pneg %p69
        %p217 = pneg %p66
        %s218 = sand.u32 %s88, 1
        %s219 = scalar_lea.sflag [#allocation18], %s218
        %s220 = sand.u32 %s88, 1
        %s221 = smul.addr %s220, 8
        %s222 = scalar_lea.vmem [#allocation17], %s221
        %p223 = pneg %p101
        %p224 = pneg %p98
        %p225 = pneg %p127
        %p226 = pneg %p124
        %s227 = sand.u32 %s114, 1
        %s228 = scalar_lea.sflag [#allocation16], %s227
        %s229 = sand.u32 %s114, 1
        %s230 = smul.addr %s229, 8
        %s231 = scalar_lea.vmem [#allocation19], %s230
        %s232 = sadd.s32 %s32, %s34
        %s233 = sld [smem:[#allocation13 + %s232]]
        %p234 = scmp.eq.s32.totalorder %s33, 0
        %p235 = scmp.eq.s32.totalorder %s34, 0
        %p236 = pnand %p234, %p235
        %p237 = pneg %p236
        // Predicated region
        $region37: #{tpu_custom_call.1} parent=27 // pred_check
          _
        $region38: #{tpu_custom_call.1} parent=27 // pred_check_branch
          %239 = sbr.rel (%p236) target = $region40
        $region39: #{tpu_custom_call.1} parent=27 // pred_region
          %vm240 = vcmask 7168
          %241 = vst.msk [vmem:[#allocation11] sm:$0xff] %vm240, 0.0
          %vm242 = vcmask 261120
          %243 = vst.msk [vmem:[#allocation4] sm:$0xff] %vm242, -1e+30
          %244 = vst.msk [vmem:[#allocation5] sm:$0xff] %vm242, 0.0
        $region40: #{tpu_custom_call.1} parent=27 // pred_fallthru
          _
        // Predicated region
        $region41: #{tpu_custom_call.1} parent=27 // pred_check
          %p245 = pneg %p234
        $region42: #{tpu_custom_call.1} parent=27 // pred_check_branch
          %247 = sbr.rel (%p245) target = $region44
        $region43: #{tpu_custom_call.1} parent=27 // pred_region
          %s248 = smul.u32 %s34, 8
          %s249 = scalar_lea.vmem [#allocation8], %s248
          %vm250 = vcmask 261120
          %251 = vst.msk [vmem:[%s249] sm:$0xff] %vm250, -1e+30
          %s252 = scalar_lea.vmem [#allocation9], %s248
          %253 = vst.msk [vmem:[%s252] sm:$0xff] %vm250, 0.0
          %s254 = scalar_lea.vmem [#allocation10], %s248
          %255 = vst.msk [vmem:[%s254] sm:$0xff] %vm250, 0.0
        $region44: #{tpu_custom_call.1} parent=27 // pred_fallthru
          _
        // Predicated region
        $region45: #{tpu_custom_call.1} parent=27 // pred_check
          %p256 = pneg %p235
        $region46: #{tpu_custom_call.1} parent=27 // pred_check_branch
          %258 = sbr.rel (%p256) target = $region48
        $region47: #{tpu_custom_call.1} parent=27 // pred_region
          %v259 = vld [vmem:[%s197] sm:$0xff]
          %v260 = vmul.f32 %v259, 21.052631
          %v261 = vld [vmem:[#allocation4] sm:$0xff]
          %v262 = vmax.f32 %v261, %v260
          %v263 = vsub.f32 %v261, %v262
          %v264 = vmul.f32 %v263, 1.442695
          %v265 = vpow.pop %v264
          %v266 = vld [vmem:[#allocation5] sm:$0xff]
          %v267 = vmul.f32 %v265, %v266
          %v268 = vsub.f32 %v260, %v262
          %v269 = vmul.f32 %v268, 1.442695
          %v270 = vpow.pop %v269
          %vm271 = vcmask 261120
          %272 = vst.msk [vmem:[#allocation2] sm:$0xff] %vm271, %v270
          %v273 = vadd.f32 %v267, %v270
          %274 = vst.msk [vmem:[#allocation4] sm:$0xff] %vm271, %v262
          %275 = vst.msk [vmem:[#allocation5] sm:$0xff] %vm271, %v273
          %276 = vst.msk [vmem:[#allocation3] sm:$0xff] %vm271, %v265
        $region48: #{tpu_custom_call.1} parent=27 // pred_fallthru
          _
        %v277 = vld [vmem:[%s206] sm:$0xff]
        %v278 = vmul.f32 %v277, 10.0
        %s279 = smul.u32 %s34, 8
        %s280 = scalar_lea.vmem [#allocation8], %s279
        %v281 = vld [vmem:[%s280] sm:$0xff]
        %v282 = vmax.f32 %v281, %v278
        %v283 = vsub.f32 %v281, %v282
        %v284 = vmul.f32 %v283, 1.442695
        %v285 = vpow.pop %v284
        %s286 = scalar_lea.vmem [#allocation9], %s279
        %v287 = vld [vmem:[%s286] sm:$0xff]
        %v288 = vmul.f32 %v285, %v287
        %v289 = vld [vmem:[#allocation3] sm:$0xff]
        %s290 = scalar_lea.vmem [#allocation10], %s279
        %v291 = vld [vmem:[%s290] sm:$0xff]
        %v292 = vmul.f32 %v289, %v291
        %v293 = vsub.f32 %v278, %v282
        %v294 = vmul.f32 %v293, 1.442695
        %v295 = vpow.pop %v294
        %v296 = vadd.f32 %v288, %v295
        %v297 = vld [vmem:[#allocation2] sm:$0xff]
        %v298 = vmul.f32 %v297, %v278
        %v299 = vadd.f32 %v292, %v298
        %vm300 = vcmask 261120
        %301 = vst.msk [vmem:[%s280] sm:$0xff] %vm300, %v282
        %302 = vst.msk [vmem:[%s286] sm:$0xff] %vm300, %v296
        %303 = vst.msk [vmem:[%s290] sm:$0xff] %vm300, %v299
        // Predicated region
        $region49: #{tpu_custom_call.1} parent=27 // pred_check
          _
        $region50: #{tpu_custom_call.1} parent=27 // pred_check_branch
          %305 = sbr.rel (%p236) target = $region52
        $region51: #{tpu_custom_call.1} parent=27 // pred_region
          %v306 = vld [vmem:[#allocation4] sm:$0xff]
          %v307 = vsel %vm300, %v306, -inf
          %308 = vmax.xlane.f32.xlu0 %v307
          %v309 = vpop.xlane.xlu0 %308
          %v310 = vsub.f32 %v306, %v309
          %v311 = vmul.f32 %v310, 1.442695
          %v312 = vpow.pop %v311
          %313 = vst.msk [vmem:[#allocation6] sm:$0xff] %vm300, %v312
          %v314 = vld [vmem:[#allocation5] sm:$0xff]
          %v315 = vmul.f32 %v312, %v314
          %v316 = vsel %vm300, %v315, 0.0
          %317 = vadd.xlane.f32.xlu0 %v316
          %v318 = vpop.xlane.xlu0 %317
          %v319 = vrcp.pop %v318
          %v320 = vmul.f32 1.0, %v319
          %vm321 = vcmask 7168
          %322 = vst.msk [vmem:[#allocation7] sm:$0xff] %vm321, %v320
        $region52: #{tpu_custom_call.1} parent=27 // pred_fallthru
          _
        // Predicated region
        $region53: #{tpu_custom_call.1} parent=27 // pred_check
          %p323 = pneg %p234
        $region54: #{tpu_custom_call.1} parent=27 // pred_check_branch
          %325 = sbr.rel (%p323) target = $region56
        $region55: #{tpu_custom_call.1} parent=27 // pred_region
          %v326 = vld [vmem:[%s280] sm:$0xff]
          %v327 = vld [vmem:[#allocation6] sm:$0xff]
          %v328 = vld [vmem:[%s290] sm:$0xff]
          %v329 = vmul.f32 %v327, %v328
          %v330 = vsel %vm300, %v329, 0.0
          %331 = vadd.xlane.f32.xlu0 %v330
          %v332 = vpop.xlane.xlu0 %331
          %v333 = vsel %vm300, %v326, -inf
          %334 = vmax.xlane.f32.xlu0 %v333
          %v335 = vpop.xlane.xlu0 %334
          %v336 = vsub.f32 %v326, %v335
          %v337 = vmul.f32 %v336, 1.442695
          %v338 = vpow.pop %v337
          %v339 = vld [vmem:[%s286] sm:$0xff]
          %v340 = vmul.f32 %v338, %v339
          %v341 = vsel %vm300, %v340, 0.0
          %342 = vadd.xlane.f32.xlu0 %v341
          %v343 = vpop.xlane.xlu0 %342
          %v344 = vlog2.pop %v343
          %v345 = vmul.f32 %v344, 0.6931472
          %v346 = vadd.f32 %v335, %v345
          %v347 = vld [vmem:[#allocation7] sm:$0xff]
          %v348 = vmul.f32 %v332, %v347
          %v349 = vsub.f32 %v346, %v348
          %v350 = vld [vmem:[#allocation11] sm:$0xff]
          %v351 = vadd.f32 %v350, %v349
          %vm352 = vcmask 7168
          %353 = vst.msk [vmem:[#allocation11] sm:$0xff] %vm352, %v351
        $region56: #{tpu_custom_call.1} parent=27 // pred_fallthru
          _
        // Predicated region
        $region57: #{tpu_custom_call.1} parent=27 // pred_check
          _
        $region58: #{tpu_custom_call.1} parent=27 // pred_check_branch
          %355 = sbr.rel (%p236) target = $region60
        $region59: #{tpu_custom_call.1} parent=27 // pred_region
          %v356 = vld [vmem:[#allocation11] sm:$0xff]
          %vm357 = vcmask 7168
          %v358 = vsel %vm357, %v356, 0.0
          %359 = vadd.xlane.f32.xlu0 %v358
          %v360 = vpop.xlane.xlu0 %359
          %v361 = vrot.slane %v360, 4
          %v362 = vadd.f32 %v360, %v361
          %v363 = vrot.slane %v362, 2
          %v364 = vadd.f32 %v362, %v363
          %v365 = vrot.slane %v364, 1
          %v366 = vadd.f32 %v364, %v365
          %s367 = vtos %v366
          %v368 = vstv %s367
          %369 = vst [vmem:[%s231] sm:$0xff] %v368
        $region60: #{tpu_custom_call.1} parent=27 // pred_fallthru
          _
        %s370 = sand.u32 %s114, 1
        %s371 = scalar_lea.sflag [#allocation16], %s370
        %s372 = sand.u32 %s114, 1
        %s373 = smul.addr %s372, 8
        %s374 = scalar_lea.vmem [#allocation19], %s373
        // Predicated region
        $region61: #{tpu_custom_call.1} parent=27 // pred_check
          %p375 = pneg %p124
        $region62: #{tpu_custom_call.1} parent=27 // pred_check_branch
          %377 = sbr.rel (%p375) target = $region64
        $region63: #{tpu_custom_call.1} parent=27 // pred_region
          %s379 = ssub.s32 128, 128
          %380 = vsyncadd %s371, %s379
          %s381 = smul.addr %s32, 128
          %s382 = scalar_lea.hbm %s3, %s381
          %s384 = sshll.u32 %s374, 4
          %s385 = int_to_ptr.vmem [resolvable:$true] %s384
          %387 = dma.vmem_to_hbm [thread:$0]  %s385, 128, %s382, %s371
        $region64: #{tpu_custom_call.1} parent=27 // pred_fallthru
          _
      $region28: #{tpu_custom_call.1} parent=5 // pred_fallthru
        _
      %p388 = scmp.le.s32.totalorder 2, %s22
      // Predicated region
      $region65: #{tpu_custom_call.1} parent=5 // pred_check
        %p389 = pneg %p388
      $region66: #{tpu_custom_call.1} parent=5 // pred_check_branch
        %391 = sbr.rel (%p389) target = $region68
      $region67: #{tpu_custom_call.1} parent=5 // pred_region
        %s392 = ssub.s32 %s22, 2
        // Predicated region
        $region69: #{tpu_custom_call.1} parent=67 // pred_check
          %p393 = pneg %p130
        $region70: #{tpu_custom_call.1} parent=67 // pred_check_branch
          %395 = sbr.rel (%p393) target = $region72
        $region71: #{tpu_custom_call.1} parent=67 // pred_region
          %s396 = sand.u32 %s115, 1
          %s397 = scalar_lea.sflag [#allocation16], %s396
          %s398 = sand.u32 %s115, 1
          %s399 = smul.addr %s398, 8
          %s400 = scalar_lea.vmem [#allocation19], %s399
          %401 = dma.done %s397, 128
        $region72: #{tpu_custom_call.1} parent=67 // pred_fallthru
          _
      $region68: #{tpu_custom_call.1} parent=5 // pred_fallthru
        _
    $region6: #{tpu_custom_call.1} parent=1 // loop_footer
      %s26 = sadd.s32 1, %s22
    $region7: #{tpu_custom_call.1} parent=1 // loop_footer_branch
      %21 = sbr.rel target = $region3
    $region8: #{tpu_custom_call.1} parent=1 // loop_exit
      _
    %402 = vsyncpa [#allocation15], 1
    %s403 = scalar_lea.sflag [#allocation15], 1
    %404 = vsyncpa %s403, 1
    %405 = vsyncpa [#allocation18], 1
    %s406 = scalar_lea.sflag [#allocation18], 1
    %407 = vsyncpa %s406, 1
    %408 = vsyncpa [#allocation16], 1
    %s409 = scalar_lea.sflag [#allocation16], 1
    %410 = vsyncpa %s409, 1

</llo_original>
